<compile_context>
chip_gen: v6e
topology: v6e:2x2x1
jax: 0.10.0
libtpu: 0.0.40
codegen_flags: <defaults>
</compile_context>

<pallas_src>
import jax
import jax.numpy as jnp
from jax.experimental import pallas as pl
from jax.experimental.pallas import tpu as pltpu


def _gcn_matmul_kernel(t_ref, x_ref, b_ref, o_ref):
    # t_ref: (RB, K)   fused (graph-propagation x 1x1-conv) operator row stripe
    # x_ref: (K, TM)   input tile; fused batch*time axis M on lanes
    # b_ref: (RB, 1)   conv bias, pre-expanded over the node axis
    # o_ref: (RB, TM)  output tile; lane-dense unmasked stores
    acc = jnp.dot(t_ref[...], x_ref[...], preferred_element_type=jnp.float32)
    o_ref[...] = (acc + b_ref[...].astype(jnp.float32)).astype(o_ref.dtype)


def _choose_tiles(R, M):
    """Pick row-stripe RB (divides R, multiple of 8 when possible) and lane tile TM
    (multiple of 128, aiming for 512 lanes ~ 85% of measured HBM roofline).
    Guarantees >=2 total grid steps when possible so v7x can shard the parallel
    axes across both TensorCores."""
    RB = R
    for cand in (256, 128, 64, 32, 16, 8):
        if R % cand == 0:
            RB = cand
            break
    TM = 512 if M >= 512 else ((M + 127) // 128) * 128
    m_pad = ((M + TM - 1) // TM) * TM
    if (R // RB) * (m_pad // TM) < 2 and RB % 16 == 0:
        RB //= 2
    return RB, TM, m_pad


def gcn_forward(x_nchw, supports, w_conv, b_conv, *, order=2,
                matmul_dtype=jnp.float32):
    """x_nchw: (N, C, V, L); supports: list of (V, V); w_conv: (C_out, P*C);
    b_conv: (C_out,).  Returns (N, C_out, V, L)."""
    N, C, V, L = x_nchw.shape
    S = len(supports)
    P = order * S + 1
    c_out, k_cols = w_conv.shape
    assert k_cols == P * C, (k_cols, P, C)
    M = N * L
    R = c_out * V                      # fused output rows (o, v)
    K = C * V                          # fused contraction axis (c, w)
    f32 = jnp.float32

    # ---- host-side precompute (M-independent, negligible cost) -------------
    # Stacked propagation operators Op_p in the PyTorch concat (piece) order.
    ops = [jnp.eye(V, dtype=f32)]
    for a in supports:
        at = jnp.asarray(a, f32).T     # nconv is x1 = A^T x along the node axis
        p = at
        ops.append(p)
        for _ in range(order - 1):
            p = at @ p                 # (A^T)^k
            ops.append(p)
    ops = jnp.stack(ops, axis=0)                                   # (P, V, V)
    # Fold the 1x1-conv weight; its columns are (piece, c_in) = PyTorch cat order.
    w3 = jnp.asarray(w_conv, f32).reshape(c_out, P, C)             # W[o, p, c]
    t_full = jnp.einsum('opc,pvw->ovcw', w3, ops).reshape(R, K)    # T[(o,v),(c,w)]
    bias = jnp.broadcast_to(jnp.asarray(b_conv, f32)[:, None],
                            (c_out, V)).reshape(R, 1)

    # ---- layout plumbing: put the fused batch*time axis M on lanes ---------
    x2d = jnp.transpose(x_nchw, (1, 2, 0, 3)).reshape(K, M)        # rows = (c, w)

    RB, TM, m_pad = _choose_tiles(R, M)
    if m_pad > M:                      # pad host-side; sliced off after the kernel
        x2d = jnp.pad(x2d, ((0, 0), (0, m_pad - M)))

    t_k = t_full.astype(matmul_dtype)
    x_k = x2d.astype(matmul_dtype)

    # inner grid axis = m tiles: the T row stripe's block index is constant across
    # it, so Pallas keeps the operator resident (weight-stationary).
    grid = (R // RB, m_pad // TM)

    est_vmem = 4 * (2 * (K * TM + RB * TM) + RB * K + RB) + 4096
    vmem_limit = int(min(max(4 * est_vmem, 32 << 20), 48 << 20))   # safe on v7x 64MiB

    cost = pl.CostEstimate(
        flops=2 * R * K * m_pad + R * m_pad,
        transcendentals=0,
        bytes_accessed=int(x_k.size * x_k.dtype.itemsize
                           + R * m_pad * 4
                           + t_k.size * t_k.dtype.itemsize
                           + R * 4),
    )

    out2d = pl.pallas_call(
        _gcn_matmul_kernel,
        out_shape=jax.ShapeDtypeStruct((R, m_pad), x_nchw.dtype),
        grid_spec=pltpu.PrefetchScalarGridSpec(
            num_scalar_prefetch=0,
            grid=grid,
            in_specs=[
                pl.BlockSpec((RB, K), lambda r, m: (r, 0)),
                pl.BlockSpec((K, TM), lambda r, m: (0, m)),
                pl.BlockSpec((RB, 1), lambda r, m: (r, 0)),
            ],
            out_specs=pl.BlockSpec((RB, TM), lambda r, m: (r, m)),
        ),
        compiler_params=pltpu.CompilerParams(
            dimension_semantics=("parallel", "parallel"),
            vmem_limit_bytes=vmem_limit,
        ),
        cost_estimate=cost,
    )(t_k, x_k, bias)

    out = out2d[:, :M].reshape(c_out, V, N, L)
    # TODO(synk): training-mode dropout (stateful RNG) not implemented; eval mode => identity.
    return jnp.transpose(out, (2, 0, 1, 3))                        # (N, C_out, V, L)


def gcn_reference(x, supports, w_conv, b_conv, *, order=2):
    """Pure-JAX replica of the PyTorch forward (eval mode)."""
    out = [x]
    for a in supports:
        x1 = jnp.einsum('ncvl,vw->ncwl', x, a)
        out.append(x1)
        for _ in range(2, order + 1):
            x2 = jnp.einsum('ncvl,vw->ncwl', x1, a)
            out.append(x2)
            x1 = x2
    h = jnp.concatenate(out, axis=1)
    return jnp.einsum('oc,ncvl->novl', w_conv, h) + b_conv[None, :, None, None]


if __name__ == "__main__":
    # small shapes consistent with the module: batch=2, c_in=4, nodes=16, seq=8
    N, C_in, V, L = 2, 4, 16, 8
    support_len, order = 3, 2
    c_out = 32
    c_in_total = (order * support_len + 1) * C_in   # 28

    key = jax.random.PRNGKey(0)
    k_x, k_a, k_w, k_b = jax.random.split(key, 4)

    x = jax.random.normal(k_x, (N, C_in, V, L), dtype=jnp.float32)
    # adjacency-like supports (non-negative, scaled like a normalized adjacency)
    supports = [
        jax.random.uniform(k, (V, V), dtype=jnp.float32) / V
        for k in jax.random.split(k_a, support_len)
    ]
    # Conv2d(c_in_total, c_out, kernel_size=1) parameters (weight squeezed to 2D)
    w_conv = jax.random.normal(k_w, (c_out, c_in_total), dtype=jnp.float32) * (
        1.0 / jnp.sqrt(c_in_total)
    )
    b_conv = jax.random.normal(k_b, (c_out,), dtype=jnp.float32) * 0.1

    y = gcn_forward(x, supports, w_conv, b_conv, order=order)
    y = jax.block_until_ready(y)

    y_ref = gcn_reference(x, supports, w_conv, b_conv, order=order)
    assert y.shape == (N, c_out, V, L), y.shape
    assert jnp.allclose(y, y_ref, rtol=1e-2, atol=1e-2), float(
        jnp.max(jnp.abs(y - y_ref))
    )

    print("KERNEL_OK")
</pallas_src>

<mosaic_0001>
module attributes {stable_mosaic.version = 11 : i64} {
  func.func @_gcn_matmul_kernel(%arg0: i32, %arg1: i32, %arg2: memref<256x64xf32, #tpu.memory_space<vmem>>, %arg3: memref<64x128xf32, #tpu.memory_space<vmem>>, %arg4: memref<256x1xf32, #tpu.memory_space<vmem>>, %arg5: memref<256x128xf32, #tpu.memory_space<vmem>>) attributes {dimension_semantics = [#tpu.dimension_semantics<parallel>, #tpu.dimension_semantics<parallel>], iteration_bounds = array<i64: 2, 1>, scalar_prefetch = 0 : i64, scratch_operands = 0 : i64, tpu.core_type = #tpu.core_type<tc>, window_params = [{transform_indices = @transform_0, window_bounds = array<i64: 256, 64>}, {transform_indices = @transform_1, window_bounds = array<i64: 64, 128>}, {transform_indices = @transform_2, window_bounds = array<i64: 256, 1>}, {transform_indices = @transform_3, window_bounds = array<i64: 256, 128>}]} {
    %c0 = arith.constant 0 : index
    %c0_0 = arith.constant 0 : index
    %0 = vector.load %arg2[%c0, %c0_0] : memref<256x64xf32, #tpu.memory_space<vmem>>, vector<256x64xf32>
    %c0_1 = arith.constant 0 : index
    %c0_2 = arith.constant 0 : index
    %1 = vector.load %arg3[%c0_1, %c0_2] : memref<64x128xf32, #tpu.memory_space<vmem>>, vector<64x128xf32>
    %cst = arith.constant dense<0.000000e+00> : vector<256x128xf32>
    %2 = tpu.matmul %0, %1, %cst {dimension_numbers = #tpu.dot_dimension_numbers<[1], [0], [0], [1], [0, 0, 1, 1], [], []>} : vector<256x64xf32>, vector<64x128xf32>, vector<256x128xf32> -> vector<256x128xf32>
    %c0_3 = arith.constant 0 : index
    %c0_4 = arith.constant 0 : index
    %3 = vector.load %arg4[%c0_3, %c0_4] : memref<256x1xf32, #tpu.memory_space<vmem>>, vector<256x1xf32>
    %4 = vector.broadcast %3 : vector<256x1xf32> to vector<256x128xf32>
    %5 = arith.addf %2, %4 : vector<256x128xf32>
    %c0_5 = arith.constant 0 : index
    %c0_6 = arith.constant 0 : index
    %6 = vector.load %arg5[%c0_5, %c0_6] : memref<256x128xf32, #tpu.memory_space<vmem>>, vector<256x128xf32>
    tpu.vector_store %arg5[%c0_5, %c0_6], %5 {strides = array<i32>} : memref<256x128xf32, #tpu.memory_space<vmem>>, vector<256x128xf32>,
    return
  }
  func.func @transform_0(%arg0: i32, %arg1: i32) -> (i32, i32) {
    %c0_i32 = arith.constant 0 : i32
    %c0_i32_0 = arith.constant 0 : i32
    return %arg0, %c0_i32 : i32, i32
  }
  func.func @transform_1(%arg0: i32, %arg1: i32) -> (i32, i32) {
    %c0_i32 = arith.constant 0 : i32
    %c0_i32_0 = arith.constant 0 : i32
    return %c0_i32, %arg1 : i32, i32
  }
  func.func @transform_2(%arg0: i32, %arg1: i32) -> (i32, i32) {
    %c0_i32 = arith.constant 0 : i32
    %c0_i32_0 = arith.constant 0 : i32
    return %arg0, %c0_i32 : i32, i32
  }
  func.func @transform_3(%arg0: i32, %arg1: i32) -> (i32, i32) {
    %c0_i32 = arith.constant 0 : i32
    return %arg0, %arg1 : i32, i32
  }
}

</mosaic_0001>

<llo_original>
// kernel: tpu_custom_call.1
$region0: #{tpu_custom_call.1}
  #allocation0 [shape = 'u32[]', space=smem, size = 0x4, offset = 0x4, fixed_abs, tag = 'smem constant byte address 0x4 - core index']
  #allocation1 [shape = 'u32[144,128]{1,0:T(1,128)}', space=vmem, size = 0x12000, scoped, tag = 'internal scratch']
  %s0 = inlined_call_operand.vmem [shape: f32[512,64], index: 0, kind: input, shape index: {}]
  %s1 = inlined_call_operand.vmem [shape: f32[64,128], index: 1, kind: input, shape index: {}]
  %s2 = inlined_call_operand.vmem [shape: f32[512,1], index: 2, kind: input, shape index: {}]
  %s3 = inlined_call_operand.hbm [shape: f32[512,128], index: 3, kind: output, shape index: {}]
  %s4 = sld [smem:[#allocation0]]
  $region45: #{tpu_custom_call.1} parent=0
    _
  %s6 = ssub.s32 1, %s4
  %s7 = scalar_select 0, %s6, %s4
  $region1: #{tpu_custom_call.1} parent=0
    #allocation2 [shape = 'u8[262144]{0}', space=vmem, size = 0x40000, scoped, tag = 'output window, operand 0']
    #allocation3 [shape = 's32[2]{0}', space=sflag, size = 0x8, scoped, tag = 'scoped memory for tpu_custom_call.1']
    %8 = vsyncpa [#allocation3], 0
    %s9 = scalar_lea.sflag [#allocation3], 1
    %10 = vsyncpa %s9, 0
    loop: start=0, step=1, limit=4
    $region2: #{tpu_custom_call.1} parent=1 // loop_pre_header
      _
    $region3: #{tpu_custom_call.1} parent=1 // loop_header
      %s12 = sphi 0, %s16
      %p13 = scmp.ge.s32.totalorder %s12, 4
      %s19 = sphi 0, %s31
      %s20 = sphi 0, %s27
      %s21 = sphi 0, %s19
      %s22 = sphi 0, %s20
      %s23 = sphi 0, %s21
      %s24 = sphi 0, %s22
      %s34 = sphi 0, %s36
      %s37 = sphi 0, %s34
      %s38 = sphi 0, %s37
      %s54 = sphi 0, %s38
      %s60 = sphi 0, %s62
      %s63 = sphi 0, %s60
      %s64 = sphi 0, %s63
      %s80 = sphi 0, %s64
      %s86 = sphi 0, %s88
      %s89 = sphi 0, %s86
      %s90 = sphi 0, %s89
      %s106 = sphi 0, %s90
      %s114 = sphi 0, %s116
      %s117 = sphi 0, %s114
      %s118 = sphi 0, %s117
      %s134 = sphi 0, %s118
    $region4: #{tpu_custom_call.1} parent=1 // loop_header_branch
      %15 = sbr.rel (%p13) target = $region8
    $region5: #{tpu_custom_call.1} parent=1 // loop_body
      %s17 = ssub.s32 %s12, 1
      %s18 = ssub.s32 %s12, 2
      %s25 = sadd.s32 1, %s20
      %p26 = scmp.ge.s32.totalorder %s25, 1
      %s27 = scalar_select %p26, 0, %s25
      %s28 = sadd.s32 1, %s19
      %s29 = scalar_select %p26, %s28, %s19
      %p30 = scmp.ge.s32.totalorder %s29, 2
      %s31 = scalar_select %p30, 0, %s29
      %s32 = ssub.s32 %s19, %s31
      %p33 = scmp.eq.s32.totalorder %s32, 0
      %s35 = sadd.s32 %s34, 1
      %s36 = scalar_select %p33, %s34, %s35
      %p39 = pneg %p33
      %p40 = scmp.eq.s32.totalorder %s12, 1
      %p41 = por %p39, %p40
      %p42 = scmp.ne.s32.totalorder %s34, %s37
      %p43 = scmp.eq.s32.totalorder %s12, 0
      %p44 = por %p42, %p43
      %p45 = scmp.ne.s32.totalorder %s34, %s37
      %p46 = scmp.eq.s32.totalorder %s17, 1
      %p47 = por %p45, %p46
      %p48 = scmp.ne.s32.totalorder %s37, %s38
      %p49 = scmp.eq.s32.totalorder %s17, 0
      %p50 = por %p48, %p49
      %p51 = scmp.ne.s32.totalorder %s37, %s38
      %p52 = scmp.eq.s32.totalorder %s18, 1
      %p53 = por %p51, %p52
      %p55 = scmp.ne.s32.totalorder %s38, %s54
      %p56 = scmp.eq.s32.totalorder %s18, 0
      %p57 = por %p55, %p56
      %s58 = ssub.s32 %s20, %s27
      %p59 = scmp.eq.s32.totalorder %s58, 0
      %s61 = sadd.s32 %s60, 1
      %s62 = scalar_select %p59, %s60, %s61
      %p65 = pneg %p59
      %p66 = scmp.eq.s32.totalorder %s12, 1
      %p67 = por %p65, %p66
      %p68 = scmp.ne.s32.totalorder %s60, %s63
      %p69 = scmp.eq.s32.totalorder %s12, 0
      %p70 = por %p68, %p69
      %p71 = scmp.ne.s32.totalorder %s60, %s63
      %p72 = scmp.eq.s32.totalorder %s17, 1
      %p73 = por %p71, %p72
      %p74 = scmp.ne.s32.totalorder %s63, %s64
      %p75 = scmp.eq.s32.totalorder %s17, 0
      %p76 = por %p74, %p75
      %p77 = scmp.ne.s32.totalorder %s63, %s64
      %p78 = scmp.eq.s32.totalorder %s18, 1
      %p79 = por %p77, %p78
      %p81 = scmp.ne.s32.totalorder %s64, %s80
      %p82 = scmp.eq.s32.totalorder %s18, 0
      %p83 = por %p81, %p82
      %s84 = ssub.s32 %s19, %s31
      %p85 = scmp.eq.s32.totalorder %s84, 0
      %s87 = sadd.s32 %s86, 1
      %s88 = scalar_select %p85, %s86, %s87
      %p91 = pneg %p85
      %p92 = scmp.eq.s32.totalorder %s12, 1
      %p93 = por %p91, %p92
      %p94 = scmp.ne.s32.totalorder %s86, %s89
      %p95 = scmp.eq.s32.totalorder %s12, 0
      %p96 = por %p94, %p95
      %p97 = scmp.ne.s32.totalorder %s86, %s89
      %p98 = scmp.eq.s32.totalorder %s17, 1
      %p99 = por %p97, %p98
      %p100 = scmp.ne.s32.totalorder %s89, %s90
      %p101 = scmp.eq.s32.totalorder %s17, 0
      %p102 = por %p100, %p101
      %p103 = scmp.ne.s32.totalorder %s89, %s90
      %p104 = scmp.eq.s32.totalorder %s18, 1
      %p105 = por %p103, %p104
      %p107 = scmp.ne.s32.totalorder %s90, %s106
      %p108 = scmp.eq.s32.totalorder %s18, 0
      %p109 = por %p107, %p108
      %s110 = ssub.s32 %s19, %s31
      %s111 = ssub.s32 %s20, %s27
      %s112 = sor.u32 %s110, %s111
      %p113 = scmp.eq.s32.totalorder %s112, 0
      %s115 = sadd.s32 %s114, 1
      %s116 = scalar_select %p113, %s114, %s115
      %p119 = pneg %p113
      %p120 = scmp.eq.s32.totalorder %s12, 1
      %p121 = por %p119, %p120
      %p122 = scmp.ne.s32.totalorder %s114, %s117
      %p123 = scmp.eq.s32.totalorder %s12, 0
      %p124 = por %p122, %p123
      %p125 = scmp.ne.s32.totalorder %s114, %s117
      %p126 = scmp.eq.s32.totalorder %s17, 1
      %p127 = por %p125, %p126
      %p128 = scmp.ne.s32.totalorder %s117, %s118
      %p129 = scmp.eq.s32.totalorder %s17, 0
      %p130 = por %p128, %p129
      %p131 = scmp.ne.s32.totalorder %s117, %s118
      %p132 = scmp.eq.s32.totalorder %s18, 1
      %p133 = por %p131, %p132
      %p135 = scmp.ne.s32.totalorder %s118, %s134
      %p136 = scmp.eq.s32.totalorder %s18, 0
      %p137 = por %p135, %p136
      %p138 = scmp.le.s32.totalorder 1, %s12
      %p139 = scmp.lt.s32.totalorder %s12, 3
      %p140 = pnand %p138, %p139
      %p141 = pneg %p140
      // Predicated region
      $region9: #{tpu_custom_call.1} parent=5 // pred_check
        _
      $region10: #{tpu_custom_call.1} parent=5 // pred_check_branch
        %143 = sbr.rel (%p140) target = $region12
      $region11: #{tpu_custom_call.1} parent=5 // pred_region
        %s144 = ssub.s32 %s12, 1
        // Predicated region
        $region13: #{tpu_custom_call.1} parent=11 // pred_check
          %p145 = pneg %p76
        $region14: #{tpu_custom_call.1} parent=11 // pred_check_branch
          %147 = sbr.rel (%p145) target = $region16
        $region15: #{tpu_custom_call.1} parent=11 // pred_region
          %p148 = scmp.lt.s32.totalorder %s22, 0
          %s149 = scalar_select %p148, %s22, 0
          %s150 = smul.addr %s149, 8
          %s151 = scalar_lea.vmem %s1, %s150
        $region16: #{tpu_custom_call.1} parent=11 // pred_fallthru
          _
      $region12: #{tpu_custom_call.1} parent=5 // pred_fallthru
        _
      %p152 = scmp.lt.s32.totalorder %s12, 2
      // Predicated region
      $region17: #{tpu_custom_call.1} parent=5 // pred_check
        %p153 = pneg %p152
      $region18: #{tpu_custom_call.1} parent=5 // pred_check_branch
        %155 = sbr.rel (%p153) target = $region20
      $region19: #{tpu_custom_call.1} parent=5 // pred_region
        // Predicated region
        $region21: #{tpu_custom_call.1} parent=19 // pred_check
          %p156 = pneg %p44
        $region22: #{tpu_custom_call.1} parent=19 // pred_check_branch
          %158 = sbr.rel (%p156) target = $region24
        $region23: #{tpu_custom_call.1} parent=19 // pred_region
          %s159 = smul.u32 32, %s19
          %p160 = scmp.lt.s32.totalorder %s159, 63
          %s161 = scalar_select %p160, %s159, 63
          %s162 = smul.addr %s161, 8
          %s163 = scalar_lea.vmem %s0, %s162
          %s164 = smul.u32 32, %s19
        $region24: #{tpu_custom_call.1} parent=19 // pred_fallthru
          _
        // Predicated region
        $region25: #{tpu_custom_call.1} parent=19 // pred_check
          %p165 = pneg %p96
        $region26: #{tpu_custom_call.1} parent=19 // pred_check_branch
          %167 = sbr.rel (%p165) target = $region28
        $region27: #{tpu_custom_call.1} parent=19 // pred_region
          %s168 = smul.u32 32, %s19
          %p169 = scmp.lt.s32.totalorder %s168, 63
          %s170 = scalar_select %p169, %s168, 63
          %s171 = smul.addr %s170, 8
          %s172 = scalar_lea.vmem %s2, %s171
          %s173 = smul.u32 32, %s19
        $region28: #{tpu_custom_call.1} parent=19 // pred_fallthru
          _
      $region20: #{tpu_custom_call.1} parent=5 // pred_fallthru
        _
      %p174 = scmp.le.s32.totalorder 1, %s12
      %p175 = scmp.lt.s32.totalorder %s12, 3
      %p176 = pnand %p174, %p175
      %p177 = pneg %p176
      // Predicated region
      $region29: #{tpu_custom_call.1} parent=5 // pred_check
        _
      $region30: #{tpu_custom_call.1} parent=5 // pred_check_branch
        %179 = sbr.rel (%p176) target = $region32
      $region31: #{tpu_custom_call.1} parent=5 // pred_region
        %s180 = ssub.s32 %s12, 1
        %s181 = smul.u32 32, %s21
        %p182 = scmp.lt.s32.totalorder %s181, 63
        %s183 = scalar_select %p182, %s181, 63
        %s184 = smul.addr %s183, 8
        %s185 = scalar_lea.vmem %s0, %s184
        %p186 = pneg %p50
        %p187 = pneg %p47
        %p188 = scmp.lt.s32.totalorder %s22, 0
        %s189 = scalar_select %p188, %s22, 0
        %s190 = smul.addr %s189, 8
        %s191 = scalar_lea.vmem %s1, %s190
        %p192 = pneg %p76
        %p193 = pneg %p73
        %s194 = smul.u32 32, %s21
        %p195 = scmp.lt.s32.totalorder %s194, 63
        %s196 = scalar_select %p195, %s194, 63
        %s197 = smul.addr %s196, 8
        %s198 = scalar_lea.vmem %s2, %s197
        %p199 = pneg %p102
        %p200 = pneg %p99
        %p201 = pneg %p130
        %p202 = pneg %p127
        %s203 = sand.u32 %s117, 1
        %s204 = scalar_lea.sflag [#allocation3], %s203
        %s205 = sand.u32 %s117, 1
        %s206 = smul.addr %s205, 256
        %s207 = scalar_lea.vmem [#allocation2], %s206
        %s208 = smul.u32 32, %s21
        %p209 = scmp.lt.s32.totalorder %s208, 63
        %s210 = scalar_select %p209, %s208, 63
        %s211 = smul.addr %s210, 8
        %s212 = scalar_lea.vmem %s0, %s211
        %s213 = smul.u32 32, %s21
        %p214 = scmp.lt.s32.totalorder %s22, 0
        %s215 = scalar_select %p214, %s22, 0
        %s216 = smul.addr %s215, 8
        %s217 = scalar_lea.vmem %s1, %s216
        %s218 = smul.u32 32, %s21
        %p219 = scmp.lt.s32.totalorder %s218, 63
        %s220 = scalar_select %p219, %s218, 63
        %s221 = smul.addr %s220, 8
        %s222 = scalar_lea.vmem %s2, %s221
        %s223 = smul.u32 32, %s21
        %s224 = smul.u32 32, %s21
        %v225 = vld [vmem:[%s212] sm:$0xff]
        %v226 = vld [vmem:[%s212 + $0x8] sm:$0xff]
        %v227 = vld [vmem:[%s212 + $0x10] sm:$0xff]
        %v228 = vld [vmem:[%s212 + $0x18] sm:$0xff]
        %v229 = vld [vmem:[%s212 + $0x20] sm:$0xff]
        %v230 = vld [vmem:[%s212 + $0x28] sm:$0xff]
        %v231 = vld [vmem:[%s212 + $0x30] sm:$0xff]
        %v232 = vld [vmem:[%s212 + $0x38] sm:$0xff]
        %v233 = vld [vmem:[%s212 + $0x40] sm:$0xff]
        %v234 = vld [vmem:[%s212 + $0x48] sm:$0xff]
        %v235 = vld [vmem:[%s212 + $0x50] sm:$0xff]
        %v236 = vld [vmem:[%s212 + $0x58] sm:$0xff]
        %v237 = vld [vmem:[%s212 + $0x60] sm:$0xff]
        %v238 = vld [vmem:[%s212 + $0x68] sm:$0xff]
        %v239 = vld [vmem:[%s212 + $0x70] sm:$0xff]
        %v240 = vld [vmem:[%s212 + $0x78] sm:$0xff]
        %v241 = vld [vmem:[%s212 + $0x80] sm:$0xff]
        %v242 = vld [vmem:[%s212 + $0x88] sm:$0xff]
        %v243 = vld [vmem:[%s212 + $0x90] sm:$0xff]
        %v244 = vld [vmem:[%s212 + $0x98] sm:$0xff]
        %v245 = vld [vmem:[%s212 + $0xa0] sm:$0xff]
        %v246 = vld [vmem:[%s212 + $0xa8] sm:$0xff]
        %v247 = vld [vmem:[%s212 + $0xb0] sm:$0xff]
        %v248 = vld [vmem:[%s212 + $0xb8] sm:$0xff]
        %v249 = vld [vmem:[%s212 + $0xc0] sm:$0xff]
        %v250 = vld [vmem:[%s212 + $0xc8] sm:$0xff]
        %v251 = vld [vmem:[%s212 + $0xd0] sm:$0xff]
        %v252 = vld [vmem:[%s212 + $0xd8] sm:$0xff]
        %v253 = vld [vmem:[%s212 + $0xe0] sm:$0xff]
        %v254 = vld [vmem:[%s212 + $0xe8] sm:$0xff]
        %v255 = vld [vmem:[%s212 + $0xf0] sm:$0xff]
        %v256 = vld [vmem:[%s212 + $0xf8] sm:$0xff]
        %v257 = vld [vmem:[%s217] sm:$0xff]
        %v258 = vld [vmem:[%s217 + $0x8] sm:$0xff]
        %v259 = vld [vmem:[%s217 + $0x10] sm:$0xff]
        %v260 = vld [vmem:[%s217 + $0x18] sm:$0xff]
        %v261 = vld [vmem:[%s217 + $0x20] sm:$0xff]
        %v262 = vld [vmem:[%s217 + $0x28] sm:$0xff]
        %v263 = vld [vmem:[%s217 + $0x30] sm:$0xff]
        %v264 = vld [vmem:[%s217 + $0x38] sm:$0xff]
        %v265 = vld [vmem:[%s222] sm:$0xff]
        %v266 = vld [vmem:[%s222 + $0x8] sm:$0xff]
        %v267 = vld [vmem:[%s222 + $0x10] sm:$0xff]
        %v268 = vld [vmem:[%s222 + $0x18] sm:$0xff]
        %v269 = vld [vmem:[%s222 + $0x20] sm:$0xff]
        %v270 = vld [vmem:[%s222 + $0x28] sm:$0xff]
        %v271 = vld [vmem:[%s222 + $0x30] sm:$0xff]
        %v272 = vld [vmem:[%s222 + $0x38] sm:$0xff]
        %v273 = vld [vmem:[%s222 + $0x40] sm:$0xff]
        %v274 = vld [vmem:[%s222 + $0x48] sm:$0xff]
        %v275 = vld [vmem:[%s222 + $0x50] sm:$0xff]
        %v276 = vld [vmem:[%s222 + $0x58] sm:$0xff]
        %v277 = vld [vmem:[%s222 + $0x60] sm:$0xff]
        %v278 = vld [vmem:[%s222 + $0x68] sm:$0xff]
        %v279 = vld [vmem:[%s222 + $0x70] sm:$0xff]
        %v280 = vld [vmem:[%s222 + $0x78] sm:$0xff]
        %v281 = vld [vmem:[%s222 + $0x80] sm:$0xff]
        %v282 = vld [vmem:[%s222 + $0x88] sm:$0xff]
        %v283 = vld [vmem:[%s222 + $0x90] sm:$0xff]
        %v284 = vld [vmem:[%s222 + $0x98] sm:$0xff]
        %v285 = vld [vmem:[%s222 + $0xa0] sm:$0xff]
        %v286 = vld [vmem:[%s222 + $0xa8] sm:$0xff]
        %v287 = vld [vmem:[%s222 + $0xb0] sm:$0xff]
        %v288 = vld [vmem:[%s222 + $0xb8] sm:$0xff]
        %v289 = vld [vmem:[%s222 + $0xc0] sm:$0xff]
        %v290 = vld [vmem:[%s222 + $0xc8] sm:$0xff]
        %v291 = vld [vmem:[%s222 + $0xd0] sm:$0xff]
        %v292 = vld [vmem:[%s222 + $0xd8] sm:$0xff]
        %v293 = vld [vmem:[%s222 + $0xe0] sm:$0xff]
        %v294 = vld [vmem:[%s222 + $0xe8] sm:$0xff]
        %v295 = vld [vmem:[%s222 + $0xf0] sm:$0xff]
        %v296 = vld [vmem:[%s222 + $0xf8] sm:$0xff]
        %298 = vset.pattern.permute.xlu0 0
        %299 = vperm.xlu0 %298, %v265
        %v300 = vpop.permute.xlu0 %299
        %303 = vset.pattern.permute.xlu0 0
        %304 = vperm.xlu0 %303, %v266
        %v305 = vpop.permute.xlu0 %304
        %308 = vset.pattern.permute.xlu0 0
        %309 = vperm.xlu0 %308, %v267
        %v310 = vpop.permute.xlu0 %309
        %313 = vset.pattern.permute.xlu0 0
        %314 = vperm.xlu0 %313, %v268
        %v315 = vpop.permute.xlu0 %314
        %318 = vset.pattern.permute.xlu0 0
        %319 = vperm.xlu0 %318, %v269
        %v320 = vpop.permute.xlu0 %319
        %323 = vset.pattern.permute.xlu0 0
        %324 = vperm.xlu0 %323, %v270
        %v325 = vpop.permute.xlu0 %324
        %328 = vset.pattern.permute.xlu0 0
        %329 = vperm.xlu0 %328, %v271
        %v330 = vpop.permute.xlu0 %329
        %333 = vset.pattern.permute.xlu0 0
        %334 = vperm.xlu0 %333, %v272
        %v335 = vpop.permute.xlu0 %334
        %338 = vset.pattern.permute.xlu0 0
        %339 = vperm.xlu0 %338, %v273
        %v340 = vpop.permute.xlu0 %339
        %343 = vset.pattern.permute.xlu0 0
        %344 = vperm.xlu0 %343, %v274
        %v345 = vpop.permute.xlu0 %344
        %348 = vset.pattern.permute.xlu0 0
        %349 = vperm.xlu0 %348, %v275
        %v350 = vpop.permute.xlu0 %349
        %353 = vset.pattern.permute.xlu0 0
        %354 = vperm.xlu0 %353, %v276
        %v355 = vpop.permute.xlu0 %354
        %358 = vset.pattern.permute.xlu0 0
        %359 = vperm.xlu0 %358, %v277
        %v360 = vpop.permute.xlu0 %359
        %363 = vset.pattern.permute.xlu0 0
        %364 = vperm.xlu0 %363, %v278
        %v365 = vpop.permute.xlu0 %364
        %368 = vset.pattern.permute.xlu0 0
        %369 = vperm.xlu0 %368, %v279
        %v370 = vpop.permute.xlu0 %369
        %373 = vset.pattern.permute.xlu0 0
        %374 = vperm.xlu0 %373, %v280
        %v375 = vpop.permute.xlu0 %374
        %378 = vset.pattern.permute.xlu0 0
        %379 = vperm.xlu0 %378, %v281
        %v380 = vpop.permute.xlu0 %379
        %383 = vset.pattern.permute.xlu0 0
        %384 = vperm.xlu0 %383, %v282
        %v385 = vpop.permute.xlu0 %384
        %388 = vset.pattern.permute.xlu0 0
        %389 = vperm.xlu0 %388, %v283
        %v390 = vpop.permute.xlu0 %389
        %393 = vset.pattern.permute.xlu0 0
        %394 = vperm.xlu0 %393, %v284
        %v395 = vpop.permute.xlu0 %394
        %398 = vset.pattern.permute.xlu0 0
        %399 = vperm.xlu0 %398, %v285
        %v400 = vpop.permute.xlu0 %399
        %403 = vset.pattern.permute.xlu0 0
        %404 = vperm.xlu0 %403, %v286
        %v405 = vpop.permute.xlu0 %404
        %408 = vset.pattern.permute.xlu0 0
        %409 = vperm.xlu0 %408, %v287
        %v410 = vpop.permute.xlu0 %409
        %413 = vset.pattern.permute.xlu0 0
        %414 = vperm.xlu0 %413, %v288
        %v415 = vpop.permute.xlu0 %414
        %418 = vset.pattern.permute.xlu0 0
        %419 = vperm.xlu0 %418, %v289
        %v420 = vpop.permute.xlu0 %419
        %423 = vset.pattern.permute.xlu0 0
        %424 = vperm.xlu0 %423, %v290
        %v425 = vpop.permute.xlu0 %424
        %428 = vset.pattern.permute.xlu0 0
        %429 = vperm.xlu0 %428, %v291
        %v430 = vpop.permute.xlu0 %429
        %433 = vset.pattern.permute.xlu0 0
        %434 = vperm.xlu0 %433, %v292
        %v435 = vpop.permute.xlu0 %434
        %438 = vset.pattern.permute.xlu0 0
        %439 = vperm.xlu0 %438, %v293
        %v440 = vpop.permute.xlu0 %439
        %443 = vset.pattern.permute.xlu0 0
        %444 = vperm.xlu0 %443, %v294
        %v445 = vpop.permute.xlu0 %444
        %448 = vset.pattern.permute.xlu0 0
        %449 = vperm.xlu0 %448, %v295
        %v450 = vpop.permute.xlu0 %449
        %453 = vset.pattern.permute.xlu0 0
        %454 = vperm.xlu0 %453, %v296
        %v455 = vpop.permute.xlu0 %454
        %vm457 = vcmask 523264
        %v459 = vsel %vm457, %v225, 0
        %v462 = vsel %vm457, %v226, 0
        %v465 = vsel %vm457, %v227, 0
        %v468 = vsel %vm457, %v228, 0
        %v471 = vsel %vm457, %v229, 0
        %v474 = vsel %vm457, %v230, 0
        %v477 = vsel %vm457, %v231, 0
        %v480 = vsel %vm457, %v232, 0
        %v483 = vsel %vm457, %v233, 0
        %v486 = vsel %vm457, %v234, 0
        %v489 = vsel %vm457, %v235, 0
        %v492 = vsel %vm457, %v236, 0
        %v495 = vsel %vm457, %v237, 0
        %v498 = vsel %vm457, %v238, 0
        %v501 = vsel %vm457, %v239, 0
        %v504 = vsel %vm457, %v240, 0
        %v507 = vsel %vm457, %v241, 0
        %v510 = vsel %vm457, %v242, 0
        %v513 = vsel %vm457, %v243, 0
        %v516 = vsel %vm457, %v244, 0
        %v519 = vsel %vm457, %v245, 0
        %v522 = vsel %vm457, %v246, 0
        %v525 = vsel %vm457, %v247, 0
        %v528 = vsel %vm457, %v248, 0
        %v531 = vsel %vm457, %v249, 0
        %v534 = vsel %vm457, %v250, 0
        %v537 = vsel %vm457, %v251, 0
        %v540 = vsel %vm457, %v252, 0
        %v543 = vsel %vm457, %v253, 0
        %v546 = vsel %vm457, %v254, 0
        %v549 = vsel %vm457, %v255, 0
        %v552 = vsel %vm457, %v256, 0
        %554 = vmatprep.subr.mxu0 0.0
        %555 = vmatpush1.msra.mxu0 0.0
        %556 = vmatprep.subr.mxu0 0.0
        %557 = vmatpush1.msra.mxu0 0.0
        %558 = vmatprep.subr.mxu0 0.0
        %559 = vmatpush1.msra.mxu0 0.0
        %560 = vmatprep.subr.mxu0 0.0
        %561 = vmatpush1.msra.mxu0 0.0
        %562 = vmatprep.subr.mxu0 0.0
        %563 = vmatpush1.msra.mxu0 0.0
        %564 = vmatprep.subr.mxu0 0.0
        %565 = vmatpush1.msra.mxu0 0.0
        %566 = vmatprep.subr.mxu0 0.0
        %567 = vmatpush1.msra.mxu0 0.0
        %568 = vmatprep.subr.mxu0 0.0
        %569 = vmatpush1.msra.mxu0 0.0
        %570 = vmatprep.subr.mxu0 0.0
        %571 = vmatpush1.msra.mxu0 %v264
        %572 = vmatprep.subr.mxu0 0.0
        %573 = vmatpush1.msra.mxu0 %v263
        %574 = vmatprep.subr.mxu0 0.0
        %575 = vmatpush1.msra.mxu0 %v262
        %576 = vmatprep.subr.mxu0 0.0
        %577 = vmatpush1.msra.mxu0 %v261
        %578 = vmatprep.subr.mxu0 0.0
        %579 = vmatpush1.msra.mxu0 %v260
        %580 = vmatprep.subr.mxu0 0.0
        %581 = vmatpush1.msra.mxu0 %v259
        %582 = vmatprep.subr.mxu0 0.0
        %583 = vmatpush1.msra.mxu0 %v258
        %584 = vmatprep.subr.mxu0 0.0
        %585 = vmatpush1.msra.mxu0 %v257
        %586 = vmatprep.subr.mxu0 0.0
        %587 = vmatpush2.msra.mxu0 0.0
        %588 = vmatprep.subr.mxu0 0.0
        %589 = vmatpush2.msra.mxu0 0.0
        %590 = vmatprep.subr.mxu0 0.0
        %591 = vmatpush2.msra.mxu0 0.0
        %592 = vmatprep.subr.mxu0 0.0
        %593 = vmatpush2.msra.mxu0 0.0
        %594 = vmatprep.subr.mxu0 0.0
        %595 = vmatpush2.msra.mxu0 0.0
        %596 = vmatprep.subr.mxu0 0.0
        %597 = vmatpush2.msra.mxu0 0.0
        %598 = vmatprep.subr.mxu0 0.0
        %599 = vmatpush2.msra.mxu0 0.0
        %600 = vmatprep.subr.mxu0 0.0
        %601 = vmatpush2.msra.mxu0 0.0
        %602 = vmatprep.subr.mxu0 0.0
        %603 = vmatpush2.msra.mxu0 0.0
        %604 = vmatprep.subr.mxu0 0.0
        %605 = vmatpush2.msra.mxu0 0.0
        %606 = vmatprep.subr.mxu0 0.0
        %607 = vmatpush2.msra.mxu0 0.0
        %608 = vmatprep.subr.mxu0 0.0
        %609 = vmatpush2.msra.mxu0 0.0
        %610 = vmatprep.subr.mxu0 0.0
        %611 = vmatpush2.msra.mxu0 0.0
        %612 = vmatprep.subr.mxu0 0.0
        %613 = vmatpush2.msra.mxu0 0.0
        %614 = vmatprep.subr.mxu0 0.0
        %615 = vmatpush2.msra.mxu0 0.0
        %616 = vmatprep.subr.mxu0 0.0
        %617 = vmatpush2.msra.mxu0 0.0
        %618 = vmatprep.mubr.f32.mxu0 0.0
        %619 = vmatmul.mubr.f32.gmra.mxu0 %v459
        %v620 = vpop.f32.mrf.mxu0
        %v621 = vadd.f32 %v300, %v620
        %v622 = vpop.f32.mrf.mxu0
        %623 = vmatprep.mubr.f32.mxu0 0.0
        %624 = vmatmul.mubr.f32.gmra.mxu0 %v462
        %v625 = vpop.f32.mrf.mxu0
        %v626 = vadd.f32 %v305, %v625
        %v627 = vpop.f32.mrf.mxu0
        %628 = vmatprep.mubr.f32.mxu0 0.0
        %629 = vmatmul.mubr.f32.gmra.mxu0 %v465
        %v630 = vpop.f32.mrf.mxu0
        %v631 = vadd.f32 %v310, %v630
        %v632 = vpop.f32.mrf.mxu0
        %633 = vmatprep.mubr.f32.mxu0 0.0
        %634 = vmatmul.mubr.f32.gmra.mxu0 %v468
        %v635 = vpop.f32.mrf.mxu0
        %v636 = vadd.f32 %v315, %v635
        %v637 = vpop.f32.mrf.mxu0
        %638 = vmatprep.mubr.f32.mxu0 0.0
        %639 = vmatmul.mubr.f32.gmra.mxu0 %v471
        %v640 = vpop.f32.mrf.mxu0
        %v641 = vadd.f32 %v320, %v640
        %v642 = vpop.f32.mrf.mxu0
        %643 = vmatprep.mubr.f32.mxu0 0.0
        %644 = vmatmul.mubr.f32.gmra.mxu0 %v474
        %v645 = vpop.f32.mrf.mxu0
        %v646 = vadd.f32 %v325, %v645
        %v647 = vpop.f32.mrf.mxu0
        %648 = vmatprep.mubr.f32.mxu0 0.0
        %649 = vmatmul.mubr.f32.gmra.mxu0 %v477
        %v650 = vpop.f32.mrf.mxu0
        %v651 = vadd.f32 %v330, %v650
        %v652 = vpop.f32.mrf.mxu0
        %653 = vmatprep.mubr.f32.mxu0 0.0
        %654 = vmatmul.mubr.f32.gmra.mxu0 %v480
        %v655 = vpop.f32.mrf.mxu0
        %v656 = vadd.f32 %v335, %v655
        %v657 = vpop.f32.mrf.mxu0
        %658 = vmatprep.mubr.f32.mxu0 0.0
        %659 = vmatmul.mubr.f32.gmra.mxu0 %v483
        %v660 = vpop.f32.mrf.mxu0
        %v661 = vadd.f32 %v340, %v660
        %v662 = vpop.f32.mrf.mxu0
        %663 = vmatprep.mubr.f32.mxu0 0.0
        %664 = vmatmul.mubr.f32.gmra.mxu0 %v486
        %v665 = vpop.f32.mrf.mxu0
        %v666 = vadd.f32 %v345, %v665
        %v667 = vpop.f32.mrf.mxu0
        %668 = vmatprep.mubr.f32.mxu0 0.0
        %669 = vmatmul.mubr.f32.gmra.mxu0 %v489
        %v670 = vpop.f32.mrf.mxu0
        %v671 = vadd.f32 %v350, %v670
        %v672 = vpop.f32.mrf.mxu0
        %673 = vmatprep.mubr.f32.mxu0 0.0
        %674 = vmatmul.mubr.f32.gmra.mxu0 %v492
        %v675 = vpop.f32.mrf.mxu0
        %v676 = vadd.f32 %v355, %v675
        %v677 = vpop.f32.mrf.mxu0
        %678 = vmatprep.mubr.f32.mxu0 0.0
        %679 = vmatmul.mubr.f32.gmra.mxu0 %v495
        %v680 = vpop.f32.mrf.mxu0
        %v681 = vadd.f32 %v360, %v680
        %v682 = vpop.f32.mrf.mxu0
        %683 = vmatprep.mubr.f32.mxu0 0.0
        %684 = vmatmul.mubr.f32.gmra.mxu0 %v498
        %v685 = vpop.f32.mrf.mxu0
        %v686 = vadd.f32 %v365, %v685
        %v687 = vpop.f32.mrf.mxu0
        %688 = vmatprep.mubr.f32.mxu0 0.0
        %689 = vmatmul.mubr.f32.gmra.mxu0 %v501
        %v690 = vpop.f32.mrf.mxu0
        %v691 = vadd.f32 %v370, %v690
        %v692 = vpop.f32.mrf.mxu0
        %693 = vmatprep.mubr.f32.mxu0 0.0
        %694 = vmatmul.mubr.f32.gmra.mxu0 %v504
        %v695 = vpop.f32.mrf.mxu0
        %v696 = vadd.f32 %v375, %v695
        %v697 = vpop.f32.mrf.mxu0
        %698 = vmatprep.mubr.f32.mxu0 0.0
        %699 = vmatmul.mubr.f32.gmra.mxu0 %v507
        %v700 = vpop.f32.mrf.mxu0
        %v701 = vadd.f32 %v380, %v700
        %v702 = vpop.f32.mrf.mxu0
        %703 = vmatprep.mubr.f32.mxu0 0.0
        %704 = vmatmul.mubr.f32.gmra.mxu0 %v510
        %v705 = vpop.f32.mrf.mxu0
        %v706 = vadd.f32 %v385, %v705
        %v707 = vpop.f32.mrf.mxu0
        %708 = vmatprep.mubr.f32.mxu0 0.0
        %709 = vmatmul.mubr.f32.gmra.mxu0 %v513
        %v710 = vpop.f32.mrf.mxu0
        %v711 = vadd.f32 %v390, %v710
        %v712 = vpop.f32.mrf.mxu0
        %713 = vmatprep.mubr.f32.mxu0 0.0
        %714 = vmatmul.mubr.f32.gmra.mxu0 %v516
        %v715 = vpop.f32.mrf.mxu0
        %v716 = vadd.f32 %v395, %v715
        %v717 = vpop.f32.mrf.mxu0
        %718 = vmatprep.mubr.f32.mxu0 0.0
        %719 = vmatmul.mubr.f32.gmra.mxu0 %v519
        %v720 = vpop.f32.mrf.mxu0
        %v721 = vadd.f32 %v400, %v720
        %v722 = vpop.f32.mrf.mxu0
        %723 = vmatprep.mubr.f32.mxu0 0.0
        %724 = vmatmul.mubr.f32.gmra.mxu0 %v522
        %v725 = vpop.f32.mrf.mxu0
        %v726 = vadd.f32 %v405, %v725
        %v727 = vpop.f32.mrf.mxu0
        %728 = vmatprep.mubr.f32.mxu0 0.0
        %729 = vmatmul.mubr.f32.gmra.mxu0 %v525
        %v730 = vpop.f32.mrf.mxu0
        %v731 = vadd.f32 %v410, %v730
        %v732 = vpop.f32.mrf.mxu0
        %733 = vmatprep.mubr.f32.mxu0 0.0
        %734 = vmatmul.mubr.f32.gmra.mxu0 %v528
        %v735 = vpop.f32.mrf.mxu0
        %v736 = vadd.f32 %v415, %v735
        %v737 = vpop.f32.mrf.mxu0
        %738 = vmatprep.mubr.f32.mxu0 0.0
        %739 = vmatmul.mubr.f32.gmra.mxu0 %v531
        %v740 = vpop.f32.mrf.mxu0
        %v741 = vadd.f32 %v420, %v740
        %v742 = vpop.f32.mrf.mxu0
        %743 = vmatprep.mubr.f32.mxu0 0.0
        %744 = vmatmul.mubr.f32.gmra.mxu0 %v534
        %v745 = vpop.f32.mrf.mxu0
        %v746 = vadd.f32 %v425, %v745
        %v747 = vpop.f32.mrf.mxu0
        %748 = vmatprep.mubr.f32.mxu0 0.0
        %749 = vmatmul.mubr.f32.gmra.mxu0 %v537
        %v750 = vpop.f32.mrf.mxu0
        %v751 = vadd.f32 %v430, %v750
        %v752 = vpop.f32.mrf.mxu0
        %753 = vmatprep.mubr.f32.mxu0 0.0
        %754 = vmatmul.mubr.f32.gmra.mxu0 %v540
        %v755 = vpop.f32.mrf.mxu0
        %v756 = vadd.f32 %v435, %v755
        %v757 = vpop.f32.mrf.mxu0
        %758 = vmatprep.mubr.f32.mxu0 0.0
        %759 = vmatmul.mubr.f32.gmra.mxu0 %v543
        %v760 = vpop.f32.mrf.mxu0
        %v761 = vadd.f32 %v440, %v760
        %v762 = vpop.f32.mrf.mxu0
        %763 = vmatprep.mubr.f32.mxu0 0.0
        %764 = vmatmul.mubr.f32.gmra.mxu0 %v546
        %v765 = vpop.f32.mrf.mxu0
        %v766 = vadd.f32 %v445, %v765
        %v767 = vpop.f32.mrf.mxu0
        %768 = vmatprep.mubr.f32.mxu0 0.0
        %769 = vmatmul.mubr.f32.gmra.mxu0 %v549
        %v770 = vpop.f32.mrf.mxu0
        %v771 = vadd.f32 %v450, %v770
        %v772 = vpop.f32.mrf.mxu0
        %773 = vmatprep.mubr.f32.mxu0 0.0
        %774 = vmatmul.mubr.f32.gmra.mxu0 %v552
        %v775 = vpop.f32.mrf.mxu0
        %v776 = vadd.f32 %v455, %v775
        %v777 = vpop.f32.mrf.mxu0
        %778 = vdwg.mxu0
        %779 = vst [vmem:[%s207] sm:$0xff] %v621
        %780 = vst [vmem:[%s207 + $0x8] sm:$0xff] %v626
        %781 = vst [vmem:[%s207 + $0x10] sm:$0xff] %v631
        %782 = vst [vmem:[%s207 + $0x18] sm:$0xff] %v636
        %783 = vst [vmem:[%s207 + $0x20] sm:$0xff] %v641
        %784 = vst [vmem:[%s207 + $0x28] sm:$0xff] %v646
        %785 = vst [vmem:[%s207 + $0x30] sm:$0xff] %v651
        %786 = vst [vmem:[%s207 + $0x38] sm:$0xff] %v656
        %787 = vst [vmem:[%s207 + $0x40] sm:$0xff] %v661
        %788 = vst [vmem:[%s207 + $0x48] sm:$0xff] %v666
        %789 = vst [vmem:[%s207 + $0x50] sm:$0xff] %v671
        %790 = vst [vmem:[%s207 + $0x58] sm:$0xff] %v676
        %791 = vst [vmem:[%s207 + $0x60] sm:$0xff] %v681
        %792 = vst [vmem:[%s207 + $0x68] sm:$0xff] %v686
        %793 = vst [vmem:[%s207 + $0x70] sm:$0xff] %v691
        %794 = vst [vmem:[%s207 + $0x78] sm:$0xff] %v696
        %795 = vst [vmem:[%s207 + $0x80] sm:$0xff] %v701
        %796 = vst [vmem:[%s207 + $0x88] sm:$0xff] %v706
        %797 = vst [vmem:[%s207 + $0x90] sm:$0xff] %v711
        %798 = vst [vmem:[%s207 + $0x98] sm:$0xff] %v716
        %799 = vst [vmem:[%s207 + $0xa0] sm:$0xff] %v721
        %800 = vst [vmem:[%s207 + $0xa8] sm:$0xff] %v726
        %801 = vst [vmem:[%s207 + $0xb0] sm:$0xff] %v731
        %802 = vst [vmem:[%s207 + $0xb8] sm:$0xff] %v736
        %803 = vst [vmem:[%s207 + $0xc0] sm:$0xff] %v741
        %804 = vst [vmem:[%s207 + $0xc8] sm:$0xff] %v746
        %805 = vst [vmem:[%s207 + $0xd0] sm:$0xff] %v751
        %806 = vst [vmem:[%s207 + $0xd8] sm:$0xff] %v756
        %807 = vst [vmem:[%s207 + $0xe0] sm:$0xff] %v761
        %808 = vst [vmem:[%s207 + $0xe8] sm:$0xff] %v766
        %809 = vst [vmem:[%s207 + $0xf0] sm:$0xff] %v771
        %810 = vst [vmem:[%s207 + $0xf8] sm:$0xff] %v776
        %s811 = sand.u32 %s117, 1
        %s812 = scalar_lea.sflag [#allocation3], %s811
        %s813 = sand.u32 %s117, 1
        %s814 = smul.addr %s813, 256
        %s815 = scalar_lea.vmem [#allocation2], %s814
        // Predicated region
        $region33: #{tpu_custom_call.1} parent=31 // pred_check
          %p816 = pneg %p127
        $region34: #{tpu_custom_call.1} parent=31 // pred_check_branch
          %818 = sbr.rel (%p816) target = $region36
        $region35: #{tpu_custom_call.1} parent=31 // pred_region
          %s819 = smul.u32 32, %s21
          %s821 = ssub.s32 4096, 4096
          %822 = vsyncadd %s812, %s821
          %s823 = sadd.s32 %s22, %s819
          %s824 = smul.addr %s823, 128
          %s825 = scalar_lea.hbm %s3, %s824
          %s826 = sshll.u32 %s815, 4
          %s827 = int_to_ptr.vmem [resolvable:$true] %s826
          %832 = dma.vmem_to_hbm [thread:$0]  %s827, 4096, %s825, %s812, 128, 128, 8
        $region36: #{tpu_custom_call.1} parent=31 // pred_fallthru
          _
      $region32: #{tpu_custom_call.1} parent=5 // pred_fallthru
        _
      %p833 = scmp.le.s32.totalorder 2, %s12
      // Predicated region
      $region37: #{tpu_custom_call.1} parent=5 // pred_check
        %p834 = pneg %p833
      $region38: #{tpu_custom_call.1} parent=5 // pred_check_branch
        %836 = sbr.rel (%p834) target = $region40
      $region39: #{tpu_custom_call.1} parent=5 // pred_region
        %s837 = ssub.s32 %s12, 2
        // Predicated region
        $region41: #{tpu_custom_call.1} parent=39 // pred_check
          %p838 = pneg %p133
        $region42: #{tpu_custom_call.1} parent=39 // pred_check_branch
          %840 = sbr.rel (%p838) target = $region44
        $region43: #{tpu_custom_call.1} parent=39 // pred_region
          %s841 = sand.u32 %s118, 1
          %s842 = scalar_lea.sflag [#allocation3], %s841
          %s843 = sand.u32 %s118, 1
          %s844 = smul.addr %s843, 256
          %s845 = scalar_lea.vmem [#allocation2], %s844
          %846 = dma.done %s842, 4096
        $region44: #{tpu_custom_call.1} parent=39 // pred_fallthru
          _
      $region40: #{tpu_custom_call.1} parent=5 // pred_fallthru
        _
    $region6: #{tpu_custom_call.1} parent=1 // loop_footer
      %s16 = sadd.s32 1, %s12
    $region7: #{tpu_custom_call.1} parent=1 // loop_footer_branch
      %11 = sbr.rel target = $region3
    $region8: #{tpu_custom_call.1} parent=1 // loop_exit
      _
    %847 = vsyncpa [#allocation3], 1
    %s848 = scalar_lea.sflag [#allocation3], 1
    %849 = vsyncpa %s848, 1

</llo_original>
